<compile_context>
chip_gen: v7x
topology: tpu7x:2x2x1
jax: 0.10.0
libtpu: 0.0.40
codegen_flags: <defaults>
</compile_context>

<pallas_src>
import numpy as np

import jax
import jax.numpy as jnp
from jax import lax
from jax.experimental import pallas as pl
from jax.experimental.pallas import tpu as pltpu


# ----------------------------------------------------------------------------
# Fused attention kernel (one program == BB batch rows)
# ----------------------------------------------------------------------------

def _attention_kernel(h_ref, k_ref, v_ref, m_ref, ctx_ref, energy_ref):
    h = h_ref[...]        # (BB, 1, D)   native dtype (bf16/f32)
    k = k_ref[...]        # (BB, T, D)
    v = v_ref[...]        # (BB, T, D)
    m = m_ref[...]        # (BB, 1, T)   f32

    # energy[b, 0, t] = <keys[b, t, :], hidden[b, :]>  (MXU, f32 accumulation)
    energy = jnp.einsum("bmd,btd->bmt", h, k,
                        preferred_element_type=jnp.float32)      # (BB, 1, T)

    # Softmax + mask + L1 renorm with the softmax denominator cancelled:
    #   softmax(e)*m / sum(softmax(e)*m) == exp(e-max)*m / sum(exp(e-max)*m)
    e = energy - jnp.max(energy, axis=2, keepdims=True)
    p = jnp.exp(e)                                               # (BB, 1, T) f32
    masked = p * m                                               # (BB, 1, T) f32
    denom = jnp.sum(masked, axis=2, keepdims=True)               # (BB, 1, 1)
    inv = pl.reciprocal(jnp.maximum(denom, 1e-12), approx=True)  # EUP slot

    # context = masked_attention @ values  (MXU, f32 accumulation)
    ctx = jnp.einsum("bmt,btd->bmd", masked.astype(v.dtype), v,
                     preferred_element_type=jnp.float32)         # (BB, 1, D)

    ctx_ref[...] = (ctx * inv).astype(ctx_ref.dtype)
    energy_ref[...] = energy.astype(energy_ref.dtype)


def _largest_divisor_leq(n, cap):
    cap = max(1, min(n, cap))
    best = 1
    for c in range(1, cap + 1):
        if n % c == 0:
            best = c
    return best


def _pick_block_batch(B, T, D, itemsize):
    """Rows per grid step, sized against HBM-roofline block targets + VMEM."""
    per_row = 2 * T * D * itemsize          # keys + values bytes for one row
    target_bytes = 2 * 1024 * 1024          # ~2 MiB/step -> ~85%+ of HBM BW
    vmem_budget = 20 * 1024 * 1024          # double-buffered K+V blocks (v7x-safe)
    bb_cap = max(1, min(target_bytes // max(per_row, 1),
                        vmem_budget // max(2 * per_row, 1)))
    if B > 1:
        # Keep >= 2 grid steps so both v7x TensorCores get work.
        bb_cap = min(bb_cap, max(1, B // 2))
    return _largest_divisor_leq(B, bb_cap)


@jax.jit
def attention_forward(hidden2, keys, values, mask):
    """hidden2: (B, D); keys/values: (B, T, D); mask: (B, T).

    Returns (context (B, D) f32, energy (B, T) f32) -- all on device.
    Inputs are used in their native dtype (bf16 recommended for keys/values).
    """
    B, T, D = keys.shape
    f32 = jnp.float32

    # Pure reshapes (no padded copies, no dtype up-casts).
    hidden3 = hidden2[:, None, :]                     # (B, 1, D)
    mask3 = mask.astype(f32)[:, None, :]              # (B, 1, T)

    BB = _pick_block_batch(B, T, D, keys.dtype.itemsize)
    grid = (B // BB,)

    ctx, energy = pl.pallas_call(
        _attention_kernel,
        grid=grid,
        in_specs=[
            pl.BlockSpec((BB, 1, D), lambda b: (b, 0, 0)),   # hidden2
            pl.BlockSpec((BB, T, D), lambda b: (b, 0, 0)),   # keys
            pl.BlockSpec((BB, T, D), lambda b: (b, 0, 0)),   # values
            pl.BlockSpec((BB, 1, T), lambda b: (b, 0, 0)),   # mask
        ],
        out_specs=(
            pl.BlockSpec((BB, 1, D), lambda b: (b, 0, 0)),   # context
            pl.BlockSpec((BB, 1, T), lambda b: (b, 0, 0)),   # energy
        ),
        out_shape=(
            jax.ShapeDtypeStruct((B, 1, D), f32),
            jax.ShapeDtypeStruct((B, 1, T), f32),
        ),
        compiler_params=pltpu.CompilerParams(
            dimension_semantics=("parallel",),
            vmem_limit_bytes=48 * 1024 * 1024,
        ),
    )(hidden3, keys, values, mask3)

    return ctx[:, 0, :], energy[:, 0, :]


class Attention:
    """Mirrors the PyTorch Attention module's forward return values."""

    def __call__(self, hidden2, keys, values, mask):
        context, energy = attention_forward(hidden2, keys, values, mask)
        # Reference returns energy.cpu().squeeze(2).numpy()[0] -- single host
        # transfer, done here outside the kernel path.
        return context, np.asarray(energy[0])


# ----------------------------------------------------------------------------

if __name__ == "__main__":
    B, T, D = 2, 8, 64

    root = jax.random.PRNGKey(0)
    k1, k2, k3 = jax.random.split(root, 3)
    # Keep the dominant tensors in bf16 (halves HBM bytes on this
    # bandwidth-bound kernel); accumulation stays in f32 inside the kernel.
    hidden2 = jax.random.normal(k1, (B, D), jnp.float32).astype(jnp.bfloat16)
    keys = jax.random.normal(k2, (B, T, D), jnp.float32).astype(jnp.bfloat16)
    values = jax.random.normal(k3, (B, T, D), jnp.float32).astype(jnp.bfloat16)
    lens = jnp.array([T, 5], jnp.int32)
    mask = (jnp.arange(T)[None, :] < lens[:, None]).astype(jnp.float32)

    attn = Attention()
    context, figure = attn(hidden2, keys, values, mask)
    context = jax.block_until_ready(context)

    # Pure-JAX f32 reference (same math as the PyTorch module) on the same
    # bf16-rounded inputs.
    hf = hidden2.astype(jnp.float32)
    kf = keys.astype(jnp.float32)
    vf = values.astype(jnp.float32)
    ref_energy = jnp.einsum("btd,bd->bt", kf, hf,
                            precision=lax.Precision.HIGHEST)
    ref_attn = jax.nn.softmax(ref_energy, axis=1)
    ref_masked = ref_attn * mask
    ref_norm = jnp.maximum(jnp.sum(jnp.abs(ref_masked), axis=1, keepdims=True), 1e-12)
    ref_masked = ref_masked / ref_norm
    ref_ctx = jnp.einsum("bt,btd->bd", ref_masked, vf,
                         precision=lax.Precision.HIGHEST)

    assert context.shape == (B, D)
    assert figure.shape == (T,)
    assert bool(jnp.all(jnp.isfinite(context)))
    # Context tolerance covers bf16 attention weights + approx reciprocal.
    assert bool(jnp.allclose(context, ref_ctx, atol=2.5e-2, rtol=2.5e-2))
    assert bool(np.allclose(figure, np.asarray(ref_energy[0]), atol=5e-3, rtol=5e-3))
    print("KERNEL_OK")
</pallas_src>

<mosaic_0001>
module attributes {stable_mosaic.version = 11 : i64} {
  func.func @_attention_kernel(%arg0: i32, %arg1: memref<1x1x64xbf16, #tpu.memory_space<vmem>>, %arg2: memref<1x8x64xbf16, #tpu.memory_space<vmem>>, %arg3: memref<1x8x64xbf16, #tpu.memory_space<vmem>>, %arg4: memref<1x1x8xf32, #tpu.memory_space<vmem>>, %arg5: memref<1x1x64xf32, #tpu.memory_space<vmem>>, %arg6: memref<1x1x8xf32, #tpu.memory_space<vmem>>) attributes {dimension_semantics = [#tpu.dimension_semantics<parallel>], iteration_bounds = array<i64: 2>, scalar_prefetch = 0 : i64, scratch_operands = 0 : i64, tpu.core_type = #tpu.core_type<tc>, window_params = [{transform_indices = @transform_0, window_bounds = array<i64: 1, 1, 64>}, {transform_indices = @transform_1, window_bounds = array<i64: 1, 8, 64>}, {transform_indices = @transform_2, window_bounds = array<i64: 1, 8, 64>}, {transform_indices = @transform_3, window_bounds = array<i64: 1, 1, 8>}, {transform_indices = @transform_4, window_bounds = array<i64: 1, 1, 64>}, {transform_indices = @transform_5, window_bounds = array<i64: 1, 1, 8>}]} {
    %c0 = arith.constant 0 : index
    %c0_0 = arith.constant 0 : index
    %c0_1 = arith.constant 0 : index
    %0 = vector.load %arg1[%c0, %c0_0, %c0_1] : memref<1x1x64xbf16, #tpu.memory_space<vmem>>, vector<1x1x64xbf16>
    %c0_2 = arith.constant 0 : index
    %c0_3 = arith.constant 0 : index
    %c0_4 = arith.constant 0 : index
    %1 = vector.load %arg2[%c0_2, %c0_3, %c0_4] : memref<1x8x64xbf16, #tpu.memory_space<vmem>>, vector<1x8x64xbf16>
    %c0_5 = arith.constant 0 : index
    %c0_6 = arith.constant 0 : index
    %c0_7 = arith.constant 0 : index
    %2 = vector.load %arg3[%c0_5, %c0_6, %c0_7] : memref<1x8x64xbf16, #tpu.memory_space<vmem>>, vector<1x8x64xbf16>
    %c0_8 = arith.constant 0 : index
    %c0_9 = arith.constant 0 : index
    %c0_10 = arith.constant 0 : index
    %3 = vector.load %arg4[%c0_8, %c0_9, %c0_10] : memref<1x1x8xf32, #tpu.memory_space<vmem>>, vector<1x1x8xf32>
    "tpu.trace_start"() <{level = 10 : i32, message = "bmd,btd->bmt"}> : () -> ()
    %cst = arith.constant dense<0.000000e+00> : vector<1x1x8xf32>
    %4 = tpu.matmul %0, %1, %cst {dimension_numbers = #tpu.dot_dimension_numbers<[2], [2], [1], [1], [0, 0, 0, 1, 1, 1], [0], [0]>} : vector<1x1x64xbf16>, vector<1x8x64xbf16>, vector<1x1x8xf32> -> vector<1x1x8xf32>
    "tpu.trace_stop"() : () -> ()
    %cst_11 = arith.constant dense<0xFF800000> : vector<1x1xf32>
    %5 = vector.multi_reduction <maximumf>, %4, %cst_11 [2] : vector<1x1x8xf32> to vector<1x1xf32>
    %6 = vector.shape_cast %5 : vector<1x1xf32> to vector<1x1x1xf32>
    %7 = vector.broadcast %6 : vector<1x1x1xf32> to vector<1x1x8xf32>
    %8 = arith.subf %4, %7 : vector<1x1x8xf32>
    %9 = math.exp %8 : vector<1x1x8xf32>
    %10 = arith.mulf %9, %3 : vector<1x1x8xf32>
    %cst_12 = arith.constant dense<0.000000e+00> : vector<1x1xf32>
    %11 = vector.multi_reduction <add>, %10, %cst_12 [2] : vector<1x1x8xf32> to vector<1x1xf32>
    %12 = vector.shape_cast %11 : vector<1x1xf32> to vector<1x1x1xf32>
    %cst_13 = arith.constant 9.99999996E-13 : f32
    %13 = vector.broadcast %cst_13 : f32 to vector<1x1x1xf32>
    %14 = arith.maximumf %12, %13 : vector<1x1x1xf32>
    %15 = tpu.reciprocal %14 {approx = true} : vector<1x1x1xf32> -> vector<1x1x1xf32>
    %16 = arith.truncf %10 : vector<1x1x8xf32> to vector<1x1x8xbf16>
    "tpu.trace_start"() <{level = 10 : i32, message = "bmt,btd->bmd"}> : () -> ()
    %cst_14 = arith.constant dense<0.000000e+00> : vector<1x1x64xf32>
    %17 = tpu.matmul %16, %2, %cst_14 {dimension_numbers = #tpu.dot_dimension_numbers<[2], [1], [1], [2], [0, 0, 0, 1, 1, 2], [0], [0]>} : vector<1x1x8xbf16>, vector<1x8x64xbf16>, vector<1x1x64xf32> -> vector<1x1x64xf32>
    "tpu.trace_stop"() : () -> ()
    %18 = vector.broadcast %15 : vector<1x1x1xf32> to vector<1x1x64xf32>
    %19 = arith.mulf %17, %18 : vector<1x1x64xf32>
    %c0_15 = arith.constant 0 : index
    %c0_16 = arith.constant 0 : index
    %c0_17 = arith.constant 0 : index
    %20 = vector.load %arg5[%c0_15, %c0_16, %c0_17] : memref<1x1x64xf32, #tpu.memory_space<vmem>>, vector<1x1x64xf32>
    tpu.vector_store %arg5[%c0_15, %c0_16, %c0_17], %19 {strides = array<i32>} : memref<1x1x64xf32, #tpu.memory_space<vmem>>, vector<1x1x64xf32>,
    %c0_18 = arith.constant 0 : index
    %c0_19 = arith.constant 0 : index
    %c0_20 = arith.constant 0 : index
    %21 = vector.load %arg6[%c0_18, %c0_19, %c0_20] : memref<1x1x8xf32, #tpu.memory_space<vmem>>, vector<1x1x8xf32>
    tpu.vector_store %arg6[%c0_18, %c0_19, %c0_20], %4 {strides = array<i32>} : memref<1x1x8xf32, #tpu.memory_space<vmem>>, vector<1x1x8xf32>,
    return
  }
  func.func @transform_0(%arg0: i32) -> (i32, i32, i32) {
    %c0_i32 = arith.constant 0 : i32
    %c0_i32_0 = arith.constant 0 : i32
    %c0_i32_1 = arith.constant 0 : i32
    return %arg0, %c0_i32, %c0_i32_0 : i32, i32, i32
  }
  func.func @transform_1(%arg0: i32) -> (i32, i32, i32) {
    %c0_i32 = arith.constant 0 : i32
    %c0_i32_0 = arith.constant 0 : i32
    %c0_i32_1 = arith.constant 0 : i32
    return %arg0, %c0_i32, %c0_i32_0 : i32, i32, i32
  }
  func.func @transform_2(%arg0: i32) -> (i32, i32, i32) {
    %c0_i32 = arith.constant 0 : i32
    %c0_i32_0 = arith.constant 0 : i32
    %c0_i32_1 = arith.constant 0 : i32
    return %arg0, %c0_i32, %c0_i32_0 : i32, i32, i32
  }
  func.func @transform_3(%arg0: i32) -> (i32, i32, i32) {
    %c0_i32 = arith.constant 0 : i32
    %c0_i32_0 = arith.constant 0 : i32
    %c0_i32_1 = arith.constant 0 : i32
    return %arg0, %c0_i32, %c0_i32_0 : i32, i32, i32
  }
  func.func @transform_4(%arg0: i32) -> (i32, i32, i32) {
    %c0_i32 = arith.constant 0 : i32
    %c0_i32_0 = arith.constant 0 : i32
    %c0_i32_1 = arith.constant 0 : i32
    return %arg0, %c0_i32, %c0_i32_0 : i32, i32, i32
  }
  func.func @transform_5(%arg0: i32) -> (i32, i32, i32) {
    %c0_i32 = arith.constant 0 : i32
    %c0_i32_0 = arith.constant 0 : i32
    %c0_i32_1 = arith.constant 0 : i32
    return %arg0, %c0_i32, %c0_i32_0 : i32, i32, i32
  }
}

</mosaic_0001>

<llo_original>
// kernel: attention_forward.1
$region0: #{attention_forward.1}
  #allocation0 [shape = 'u32[]', space=smem, size = 0x4, offset = 0x4, fixed_abs, tag = 'smem constant byte address 0x4 - core index']
  #allocation1 [shape = 'u32[144,128]{1,0:T(1,128)}', space=vmem, size = 0x12000, scoped, tag = 'internal scratch']
  %s0 = inlined_call_operand.vmem [shape: bf16[2,1,64], index: 0, kind: input, shape index: {}]
  %s1 = inlined_call_operand.vmem [shape: bf16[2,8,64], index: 1, kind: input, shape index: {}]
  %s2 = inlined_call_operand.vmem [shape: bf16[2,8,64], index: 2, kind: input, shape index: {}]
  %s3 = inlined_call_operand.vmem [shape: f32[2,1,8], index: 3, kind: input, shape index: {}]
  %s4 = inlined_call_operand.hbm [shape: f32[2,1,64], index: 4, kind: output, shape index: {0}]
  %s5 = inlined_call_operand.hbm [shape: f32[2,1,8], index: 5, kind: output, shape index: {1}]
  %6 = xla_tuple %s4, %s5
  %s7 = sld [smem:[#allocation0]]
  $region57: #{attention_forward.1} parent=0
    _
  %s9 = ssub.s32 1, %s7
  %s10 = scalar_select 0, %s9, %s7
  $region1: #{attention_forward.1} parent=0
    #allocation2 [shape = 'u8[1024]{0}', space=vmem, size = 0x400, scoped, tag = 'output window, operand 0']
    #allocation3 [shape = 's32[2]{0}', space=sflag, size = 0x8, scoped, tag = 'scoped memory for attention_forward.1']
    #allocation4 [shape = 'u8[1024]{0}', space=vmem, size = 0x400, scoped, tag = 'output window, operand 1']
    #allocation5 [shape = 's32[2]{0}', space=sflag, size = 0x8, scoped, tag = 'scoped memory for attention_forward.1']
    %11 = vsyncpa [#allocation3], 0
    %s12 = scalar_lea.sflag [#allocation3], 1
    %13 = vsyncpa %s12, 0
    %14 = vsyncpa [#allocation5], 0
    %s15 = scalar_lea.sflag [#allocation5], 1
    %16 = vsyncpa %s15, 0
    loop: start=0, step=1, limit=4
    $region2: #{attention_forward.1} parent=1 // loop_pre_header
      _
    $region3: #{attention_forward.1} parent=1 // loop_header
      %s18 = sphi 0, %s22
      %p19 = scmp.ge.s32.totalorder %s18, 4
      %s28 = sphi 0, %s30
      %s31 = sphi 0, %s28
      %s32 = sphi 0, %s31
      %s48 = sphi 0, %s32
      %s54 = sphi 0, %s56
      %s57 = sphi 0, %s54
      %s58 = sphi 0, %s57
      %s74 = sphi 0, %s58
      %s80 = sphi 0, %s82
      %s83 = sphi 0, %s80
      %s84 = sphi 0, %s83
      %s100 = sphi 0, %s84
      %s106 = sphi 0, %s108
      %s109 = sphi 0, %s106
      %s110 = sphi 0, %s109
      %s126 = sphi 0, %s110
      %s132 = sphi 0, %s134
      %s135 = sphi 0, %s132
      %s136 = sphi 0, %s135
      %s152 = sphi 0, %s136
      %s158 = sphi 0, %s160
      %s161 = sphi 0, %s158
      %s162 = sphi 0, %s161
      %s178 = sphi 0, %s162
    $region4: #{attention_forward.1} parent=1 // loop_header_branch
      %21 = sbr.rel (%p19) target = $region8
    $region5: #{attention_forward.1} parent=1 // loop_body
      %s23 = ssub.s32 %s18, 1
      %s24 = ssub.s32 %s18, 2
      %s25 = sadd.s32 %s18, 1
      %s26 = ssub.s32 %s18, %s25
      %p27 = scmp.eq.s32.totalorder %s26, 0
      %s29 = sadd.s32 %s28, 1
      %s30 = scalar_select %p27, %s28, %s29
      %p33 = pneg %p27
      %p34 = scmp.eq.s32.totalorder %s18, 1
      %p35 = por %p33, %p34
      %p36 = scmp.ne.s32.totalorder %s28, %s31
      %p37 = scmp.eq.s32.totalorder %s18, 0
      %p38 = por %p36, %p37
      %p39 = scmp.ne.s32.totalorder %s28, %s31
      %p40 = scmp.eq.s32.totalorder %s23, 1
      %p41 = por %p39, %p40
      %p42 = scmp.ne.s32.totalorder %s31, %s32
      %p43 = scmp.eq.s32.totalorder %s23, 0
      %p44 = por %p42, %p43
      %p45 = scmp.ne.s32.totalorder %s31, %s32
      %p46 = scmp.eq.s32.totalorder %s24, 1
      %p47 = por %p45, %p46
      %p49 = scmp.ne.s32.totalorder %s32, %s48
      %p50 = scmp.eq.s32.totalorder %s24, 0
      %p51 = por %p49, %p50
      %s52 = ssub.s32 %s18, %s25
      %p53 = scmp.eq.s32.totalorder %s52, 0
      %s55 = sadd.s32 %s54, 1
      %s56 = scalar_select %p53, %s54, %s55
      %p59 = pneg %p53
      %p60 = scmp.eq.s32.totalorder %s18, 1
      %p61 = por %p59, %p60
      %p62 = scmp.ne.s32.totalorder %s54, %s57
      %p63 = scmp.eq.s32.totalorder %s18, 0
      %p64 = por %p62, %p63
      %p65 = scmp.ne.s32.totalorder %s54, %s57
      %p66 = scmp.eq.s32.totalorder %s23, 1
      %p67 = por %p65, %p66
      %p68 = scmp.ne.s32.totalorder %s57, %s58
      %p69 = scmp.eq.s32.totalorder %s23, 0
      %p70 = por %p68, %p69
      %p71 = scmp.ne.s32.totalorder %s57, %s58
      %p72 = scmp.eq.s32.totalorder %s24, 1
      %p73 = por %p71, %p72
      %p75 = scmp.ne.s32.totalorder %s58, %s74
      %p76 = scmp.eq.s32.totalorder %s24, 0
      %p77 = por %p75, %p76
      %s78 = ssub.s32 %s18, %s25
      %p79 = scmp.eq.s32.totalorder %s78, 0
      %s81 = sadd.s32 %s80, 1
      %s82 = scalar_select %p79, %s80, %s81
      %p85 = pneg %p79
      %p86 = scmp.eq.s32.totalorder %s18, 1
      %p87 = por %p85, %p86
      %p88 = scmp.ne.s32.totalorder %s80, %s83
      %p89 = scmp.eq.s32.totalorder %s18, 0
      %p90 = por %p88, %p89
      %p91 = scmp.ne.s32.totalorder %s80, %s83
      %p92 = scmp.eq.s32.totalorder %s23, 1
      %p93 = por %p91, %p92
      %p94 = scmp.ne.s32.totalorder %s83, %s84
      %p95 = scmp.eq.s32.totalorder %s23, 0
      %p96 = por %p94, %p95
      %p97 = scmp.ne.s32.totalorder %s83, %s84
      %p98 = scmp.eq.s32.totalorder %s24, 1
      %p99 = por %p97, %p98
      %p101 = scmp.ne.s32.totalorder %s84, %s100
      %p102 = scmp.eq.s32.totalorder %s24, 0
      %p103 = por %p101, %p102
      %s104 = ssub.s32 %s18, %s25
      %p105 = scmp.eq.s32.totalorder %s104, 0
      %s107 = sadd.s32 %s106, 1
      %s108 = scalar_select %p105, %s106, %s107
      %p111 = pneg %p105
      %p112 = scmp.eq.s32.totalorder %s18, 1
      %p113 = por %p111, %p112
      %p114 = scmp.ne.s32.totalorder %s106, %s109
      %p115 = scmp.eq.s32.totalorder %s18, 0
      %p116 = por %p114, %p115
      %p117 = scmp.ne.s32.totalorder %s106, %s109
      %p118 = scmp.eq.s32.totalorder %s23, 1
      %p119 = por %p117, %p118
      %p120 = scmp.ne.s32.totalorder %s109, %s110
      %p121 = scmp.eq.s32.totalorder %s23, 0
      %p122 = por %p120, %p121
      %p123 = scmp.ne.s32.totalorder %s109, %s110
      %p124 = scmp.eq.s32.totalorder %s24, 1
      %p125 = por %p123, %p124
      %p127 = scmp.ne.s32.totalorder %s110, %s126
      %p128 = scmp.eq.s32.totalorder %s24, 0
      %p129 = por %p127, %p128
      %s130 = ssub.s32 %s18, %s25
      %p131 = scmp.eq.s32.totalorder %s130, 0
      %s133 = sadd.s32 %s132, 1
      %s134 = scalar_select %p131, %s132, %s133
      %p137 = pneg %p131
      %p138 = scmp.eq.s32.totalorder %s18, 1
      %p139 = por %p137, %p138
      %p140 = scmp.ne.s32.totalorder %s132, %s135
      %p141 = scmp.eq.s32.totalorder %s18, 0
      %p142 = por %p140, %p141
      %p143 = scmp.ne.s32.totalorder %s132, %s135
      %p144 = scmp.eq.s32.totalorder %s23, 1
      %p145 = por %p143, %p144
      %p146 = scmp.ne.s32.totalorder %s135, %s136
      %p147 = scmp.eq.s32.totalorder %s23, 0
      %p148 = por %p146, %p147
      %p149 = scmp.ne.s32.totalorder %s135, %s136
      %p150 = scmp.eq.s32.totalorder %s24, 1
      %p151 = por %p149, %p150
      %p153 = scmp.ne.s32.totalorder %s136, %s152
      %p154 = scmp.eq.s32.totalorder %s24, 0
      %p155 = por %p153, %p154
      %s156 = ssub.s32 %s18, %s25
      %p157 = scmp.eq.s32.totalorder %s156, 0
      %s159 = sadd.s32 %s158, 1
      %s160 = scalar_select %p157, %s158, %s159
      %p163 = pneg %p157
      %p164 = scmp.eq.s32.totalorder %s18, 1
      %p165 = por %p163, %p164
      %p166 = scmp.ne.s32.totalorder %s158, %s161
      %p167 = scmp.eq.s32.totalorder %s18, 0
      %p168 = por %p166, %p167
      %p169 = scmp.ne.s32.totalorder %s158, %s161
      %p170 = scmp.eq.s32.totalorder %s23, 1
      %p171 = por %p169, %p170
      %p172 = scmp.ne.s32.totalorder %s161, %s162
      %p173 = scmp.eq.s32.totalorder %s23, 0
      %p174 = por %p172, %p173
      %p175 = scmp.ne.s32.totalorder %s161, %s162
      %p176 = scmp.eq.s32.totalorder %s24, 1
      %p177 = por %p175, %p176
      %p179 = scmp.ne.s32.totalorder %s162, %s178
      %p180 = scmp.eq.s32.totalorder %s24, 0
      %p181 = por %p179, %p180
      %p182 = scmp.le.s32.totalorder 1, %s18
      %p183 = scmp.lt.s32.totalorder %s18, 3
      %p184 = pnand %p182, %p183
      %p185 = pneg %p184
      // Predicated region
      $region9: #{attention_forward.1} parent=5 // pred_check
        _
      $region10: #{attention_forward.1} parent=5 // pred_check_branch
        %187 = sbr.rel (%p184) target = $region12
      $region11: #{attention_forward.1} parent=5 // pred_region
        %s188 = ssub.s32 %s18, 1
      $region12: #{attention_forward.1} parent=5 // pred_fallthru
        _
      %p189 = scmp.lt.s32.totalorder %s18, 2
      // Predicated region
      $region13: #{attention_forward.1} parent=5 // pred_check
        %p190 = pneg %p189
      $region14: #{attention_forward.1} parent=5 // pred_check_branch
        %192 = sbr.rel (%p190) target = $region16
      $region15: #{attention_forward.1} parent=5 // pred_region
        // Predicated region
        $region17: #{attention_forward.1} parent=15 // pred_check
          %p193 = pneg %p38
        $region18: #{attention_forward.1} parent=15 // pred_check_branch
          %195 = sbr.rel (%p193) target = $region20
        $region19: #{attention_forward.1} parent=15 // pred_region
          %p196 = scmp.lt.s32.totalorder %s18, 1
          %s197 = scalar_select %p196, %s18, 1
          %s198 = scalar_lea.vmem %s0, %s197
        $region20: #{attention_forward.1} parent=15 // pred_fallthru
          _
        // Predicated region
        $region21: #{attention_forward.1} parent=15 // pred_check
          %p199 = pneg %p64
        $region22: #{attention_forward.1} parent=15 // pred_check_branch
          %201 = sbr.rel (%p199) target = $region24
        $region23: #{attention_forward.1} parent=15 // pred_region
          %p202 = scmp.lt.s32.totalorder %s18, 1
          %s203 = scalar_select %p202, %s18, 1
          %s204 = smul.addr %s203, 4
          %s205 = scalar_lea.vmem %s1, %s204
        $region24: #{attention_forward.1} parent=15 // pred_fallthru
          _
        // Predicated region
        $region25: #{attention_forward.1} parent=15 // pred_check
          %p206 = pneg %p90
        $region26: #{attention_forward.1} parent=15 // pred_check_branch
          %208 = sbr.rel (%p206) target = $region28
        $region27: #{attention_forward.1} parent=15 // pred_region
          %p209 = scmp.lt.s32.totalorder %s18, 1
          %s210 = scalar_select %p209, %s18, 1
          %s211 = smul.addr %s210, 4
          %s212 = scalar_lea.vmem %s2, %s211
        $region28: #{attention_forward.1} parent=15 // pred_fallthru
          _
        // Predicated region
        $region29: #{attention_forward.1} parent=15 // pred_check
          %p213 = pneg %p116
        $region30: #{attention_forward.1} parent=15 // pred_check_branch
          %215 = sbr.rel (%p213) target = $region32
        $region31: #{attention_forward.1} parent=15 // pred_region
          %p216 = scmp.lt.s32.totalorder %s18, 1
          %s217 = scalar_select %p216, %s18, 1
          %s218 = scalar_lea.vmem %s3, %s217
        $region32: #{attention_forward.1} parent=15 // pred_fallthru
          _
      $region16: #{attention_forward.1} parent=5 // pred_fallthru
        _
      %p219 = scmp.le.s32.totalorder 1, %s18
      %p220 = scmp.lt.s32.totalorder %s18, 3
      %p221 = pnand %p219, %p220
      %p222 = pneg %p221
      // Predicated region
      $region33: #{attention_forward.1} parent=5 // pred_check
        _
      $region34: #{attention_forward.1} parent=5 // pred_check_branch
        %224 = sbr.rel (%p221) target = $region36
      $region35: #{attention_forward.1} parent=5 // pred_region
        %s225 = ssub.s32 %s18, 1
        %p226 = scmp.lt.s32.totalorder %s23, 1
        %s227 = scalar_select %p226, %s23, 1
        %s228 = scalar_lea.vmem %s0, %s227
        %p229 = pneg %p44
        %p230 = pneg %p41
        %p231 = scmp.lt.s32.totalorder %s23, 1
        %s232 = scalar_select %p231, %s23, 1
        %s233 = smul.addr %s232, 4
        %s234 = scalar_lea.vmem %s1, %s233
        %p235 = pneg %p70
        %p236 = pneg %p67
        %p237 = scmp.lt.s32.totalorder %s23, 1
        %s238 = scalar_select %p237, %s23, 1
        %s239 = smul.addr %s238, 4
        %s240 = scalar_lea.vmem %s2, %s239
        %p241 = pneg %p96
        %p242 = pneg %p93
        %p243 = scmp.lt.s32.totalorder %s23, 1
        %s244 = scalar_select %p243, %s23, 1
        %s245 = scalar_lea.vmem %s3, %s244
        %p246 = pneg %p122
        %p247 = pneg %p119
        %p248 = pneg %p148
        %p249 = pneg %p145
        %s250 = sand.u32 %s135, 1
        %s251 = scalar_lea.sflag [#allocation3], %s250
        %s252 = sand.u32 %s135, 1
        %s253 = scalar_lea.vmem [#allocation2], %s252
        %p254 = pneg %p174
        %p255 = pneg %p171
        %s256 = sand.u32 %s161, 1
        %s257 = scalar_lea.sflag [#allocation5], %s256
        %s258 = sand.u32 %s161, 1
        %s259 = scalar_lea.vmem [#allocation4], %s258
        %p260 = scmp.lt.s32.totalorder %s23, 1
        %s261 = scalar_select %p260, %s23, 1
        %s262 = scalar_lea.vmem %s0, %s261
        %p263 = scmp.lt.s32.totalorder %s23, 1
        %s264 = scalar_select %p263, %s23, 1
        %s265 = smul.addr %s264, 4
        %s266 = scalar_lea.vmem %s1, %s265
        %p267 = scmp.lt.s32.totalorder %s23, 1
        %s268 = scalar_select %p267, %s23, 1
        %s269 = smul.addr %s268, 4
        %s270 = scalar_lea.vmem %s2, %s269
        %p271 = scmp.lt.s32.totalorder %s23, 1
        %s272 = scalar_select %p271, %s23, 1
        %s273 = scalar_lea.vmem %s3, %s272
        %v275 = vld [vmem:[%s262] sm:$0x1]
        %v276 = vld [vmem:[%s266] sm:$0xf]
        %v277 = vld [vmem:[%s270] sm:$0xf]
        %v278 = vld [vmem:[%s273] sm:$0x1]
        %vm279 = vcmask 523264
        %v281 = vsel %vm279, %v275, 0
        %v284 = vsel %vm279, %v276, 0
        %286 = vmatprep.subr.bf16.mxu0 0
        %287 = vmatpush1.bf16.xpose.msra.mxu0 %v284
        %288 = vmatprep.subr.bf16.mxu0 0
        %289 = vmatpush1.bf16.xpose.msra.mxu0 0
        %290 = vmatprep.subr.bf16.mxu0 0
        %291 = vmatpush1.bf16.xpose.msra.mxu0 0
        %292 = vmatprep.subr.bf16.mxu0 0
        %293 = vmatpush1.bf16.xpose.msra.mxu0 0
        %294 = vmatprep.subr.bf16.mxu0 0
        %295 = vmatpush1.bf16.xpose.msra.mxu0 0
        %296 = vmatprep.subr.bf16.mxu0 0
        %297 = vmatpush1.bf16.xpose.msra.mxu0 0
        %298 = vmatprep.subr.bf16.mxu0 0
        %299 = vmatpush1.bf16.xpose.msra.mxu0 0
        %300 = vmatprep.subr.bf16.mxu0 0
        %301 = vmatpush1.bf16.xpose.msra.mxu0 0
        %302 = vmatprep.subr.bf16.mxu0 0
        %303 = vmatpush1.bf16.xpose.msra.mxu0 0
        %304 = vmatprep.subr.bf16.mxu0 0
        %305 = vmatpush1.bf16.xpose.msra.mxu0 0
        %306 = vmatprep.subr.bf16.mxu0 0
        %307 = vmatpush1.bf16.xpose.msra.mxu0 0
        %308 = vmatprep.subr.bf16.mxu0 0
        %309 = vmatpush1.bf16.xpose.msra.mxu0 0
        %310 = vmatprep.subr.bf16.mxu0 0
        %311 = vmatpush1.bf16.xpose.msra.mxu0 0
        %312 = vmatprep.subr.bf16.mxu0 0
        %313 = vmatpush1.bf16.xpose.msra.mxu0 0
        %314 = vmatprep.subr.bf16.mxu0 0
        %315 = vmatpush1.bf16.xpose.msra.mxu0 0
        %316 = vmatprep.subr.bf16.mxu0 0
        %317 = vmatpush1.bf16.xpose.msra.mxu0 0
        %318 = vmatprep.mubr.bf16.mxu0 0
        %319 = vmatmul.mubr.bf16.gmra.mrb[0].mxu0 %v281
        %v320 = vpop.f32.mrb[0].mxu0
        %v321 = vadd.f32 0.0, %v320
        %v322 = vpop.f32.mrb[0].mxu0
        %v323 = vpop.f32.mrb[0].mxu0
        %v324 = vpop.f32.mrb[0].mxu0
        %325 = vdwg.mxu0
        %vm326 = vcmask 57344
        %v327 = vsel %vm326, %v321, -inf
        %328 = vmax.xlane.f32.xlu0 %v327
        %v329 = vpop.xlane.xlu0 %328
        %v330 = vsub.f32 %v321, %v329
        %v331 = vmul.f32 %v330, 1.442695
        %v332 = vpow.pop %v331
        %v333 = vmul.f32 %v332, %v278
        %v334 = vsel %vm326, %v333, 0.0
        %335 = vadd.xlane.f32.xlu0 %v334
        %v336 = vpop.xlane.xlu0 %335
        %v337 = vmax.f32 %v336, 1e-12
        %v338 = vrcp.pop %v337
        %v339 = vpack.c.bf16 %v333, %v333
        %vm340 = vcmask 64512
        %v342 = vsel %vm340, %v339, 0
        %vm344 = vcmask 1043456
        %v346 = vsel %vm344, %v277, 0
        %348 = vmatprep.subr.bf16.mxu0 0
        %349 = vmatpush1.bf16.msra.mxu0 %v346
        %350 = vmatprep.subr.bf16.mxu0 0
        %351 = vmatpush1.bf16.msra.mxu0 0
        %352 = vmatprep.subr.bf16.mxu0 0
        %353 = vmatpush1.bf16.msra.mxu0 0
        %354 = vmatprep.subr.bf16.mxu0 0
        %355 = vmatpush1.bf16.msra.mxu0 0
        %356 = vmatprep.subr.bf16.mxu0 0
        %357 = vmatpush1.bf16.msra.mxu0 0
        %358 = vmatprep.subr.bf16.mxu0 0
        %359 = vmatpush1.bf16.msra.mxu0 0
        %360 = vmatprep.subr.bf16.mxu0 0
        %361 = vmatpush1.bf16.msra.mxu0 0
        %362 = vmatprep.subr.bf16.mxu0 0
        %363 = vmatpush1.bf16.msra.mxu0 0
        %364 = vmatprep.subr.bf16.mxu0 0
        %365 = vmatpush1.bf16.msra.mxu0 0
        %366 = vmatprep.subr.bf16.mxu0 0
        %367 = vmatpush1.bf16.msra.mxu0 0
        %368 = vmatprep.subr.bf16.mxu0 0
        %369 = vmatpush1.bf16.msra.mxu0 0
        %370 = vmatprep.subr.bf16.mxu0 0
        %371 = vmatpush1.bf16.msra.mxu0 0
        %372 = vmatprep.subr.bf16.mxu0 0
        %373 = vmatpush1.bf16.msra.mxu0 0
        %374 = vmatprep.subr.bf16.mxu0 0
        %375 = vmatpush1.bf16.msra.mxu0 0
        %376 = vmatprep.subr.bf16.mxu0 0
        %377 = vmatpush1.bf16.msra.mxu0 0
        %378 = vmatprep.subr.bf16.mxu0 0
        %379 = vmatpush1.bf16.msra.mxu0 0
        %380 = vmatprep.mubr.bf16.mxu0 0
        %381 = vmatmul.mubr.bf16.gmra.mrb[0].mxu0 %v342
        %v382 = vpop.f32.mrb[0].mxu0
        %v383 = vadd.f32 0.0, %v382
        %v384 = vpop.f32.mrb[0].mxu0
        %v385 = vpop.f32.mrb[0].mxu0
        %v386 = vpop.f32.mrb[0].mxu0
        %387 = vdwg.mxu0
        %v388 = vmul.f32 %v383, %v338
        %vm389 = vcmask 516096
        %390 = vst.msk [vmem:[%s253] sm:$0x1] %vm389, %v388
        %391 = vst.msk [vmem:[%s259] sm:$0x1] %vm326, %v321
        %s392 = sand.u32 %s135, 1
        %s393 = scalar_lea.sflag [#allocation3], %s392
        %s394 = sand.u32 %s135, 1
        %s395 = scalar_lea.vmem [#allocation2], %s394
        %s396 = sand.u32 %s161, 1
        %s397 = scalar_lea.sflag [#allocation5], %s396
        %s398 = sand.u32 %s161, 1
        %s399 = scalar_lea.vmem [#allocation4], %s398
        // Predicated region
        $region37: #{attention_forward.1} parent=35 // pred_check
          %p400 = pneg %p145
        $region38: #{attention_forward.1} parent=35 // pred_check_branch
          %402 = sbr.rel (%p400) target = $region40
        $region39: #{attention_forward.1} parent=35 // pred_region
          %s404 = ssub.s32 16, 16
          %405 = vsyncadd %s393, %s404
          %s406 = smul.addr %s23, 16
          %s407 = scalar_lea.hbm %s4, %s406
          %s409 = sshll.u32 %s395, 4
          %s410 = int_to_ptr.vmem [resolvable:$true] %s409
          %412 = dma.vmem_to_hbm [thread:$0]  %s410, 16, %s407, %s393
        $region40: #{attention_forward.1} parent=35 // pred_fallthru
          _
        // Predicated region
        $region41: #{attention_forward.1} parent=35 // pred_check
          %p413 = pneg %p171
        $region42: #{attention_forward.1} parent=35 // pred_check_branch
          %415 = sbr.rel (%p413) target = $region44
        $region43: #{attention_forward.1} parent=35 // pred_region
          %s417 = ssub.s32 16, 16
          %418 = vsyncadd %s397, %s417
          %s419 = smul.addr %s23, 16
          %s420 = scalar_lea.hbm %s5, %s419
          %s422 = sshll.u32 %s399, 4
          %s423 = int_to_ptr.vmem [resolvable:$true] %s422
          %425 = dma.vmem_to_hbm [thread:$0]  %s423, 16, %s420, %s397
        $region44: #{attention_forward.1} parent=35 // pred_fallthru
          _
      $region36: #{attention_forward.1} parent=5 // pred_fallthru
        _
      %p426 = scmp.le.s32.totalorder 2, %s18
      // Predicated region
      $region45: #{attention_forward.1} parent=5 // pred_check
        %p427 = pneg %p426
      $region46: #{attention_forward.1} parent=5 // pred_check_branch
        %429 = sbr.rel (%p427) target = $region48
      $region47: #{attention_forward.1} parent=5 // pred_region
        %s430 = ssub.s32 %s18, 2
        // Predicated region
        $region49: #{attention_forward.1} parent=47 // pred_check
          %p431 = pneg %p151
        $region50: #{attention_forward.1} parent=47 // pred_check_branch
          %433 = sbr.rel (%p431) target = $region52
        $region51: #{attention_forward.1} parent=47 // pred_region
          %s434 = sand.u32 %s136, 1
          %s435 = scalar_lea.sflag [#allocation3], %s434
          %s436 = sand.u32 %s136, 1
          %s437 = scalar_lea.vmem [#allocation2], %s436
          %438 = dma.done %s435, 16
        $region52: #{attention_forward.1} parent=47 // pred_fallthru
          _
        // Predicated region
        $region53: #{attention_forward.1} parent=47 // pred_check
          %p439 = pneg %p177
        $region54: #{attention_forward.1} parent=47 // pred_check_branch
          %441 = sbr.rel (%p439) target = $region56
        $region55: #{attention_forward.1} parent=47 // pred_region
          %s442 = sand.u32 %s162, 1
          %s443 = scalar_lea.sflag [#allocation5], %s442
          %s444 = sand.u32 %s162, 1
          %s445 = scalar_lea.vmem [#allocation4], %s444
          %446 = dma.done %s443, 16
        $region56: #{attention_forward.1} parent=47 // pred_fallthru
          _
      $region48: #{attention_forward.1} parent=5 // pred_fallthru
        _
    $region6: #{attention_forward.1} parent=1 // loop_footer
      %s22 = sadd.s32 1, %s18
    $region7: #{attention_forward.1} parent=1 // loop_footer_branch
      %17 = sbr.rel target = $region3
    $region8: #{attention_forward.1} parent=1 // loop_exit
      _
    %447 = vsyncpa [#allocation3], 1
    %s448 = scalar_lea.sflag [#allocation3], 1
    %449 = vsyncpa %s448, 1
    %450 = vsyncpa [#allocation5], 1
    %s451 = scalar_lea.sflag [#allocation5], 1
    %452 = vsyncpa %s451, 1

</llo_original>
